<compile_context>
chip_gen: v6e
topology: v6e:2x2x1
jax: 0.10.0
libtpu: 0.0.40
codegen_flags: <defaults>
</compile_context>

<pallas_src>
import functools

import jax
import jax.numpy as jnp
from jax.experimental import pallas as pl
from jax.experimental.pallas import tpu as pltpu


# ---------------------------------------------------------------------------
# Parameter construction (mirrors LPFOnline.__init__, deterministic)
# ---------------------------------------------------------------------------
def build_lpf_taps(kernel_size: int, tau_mem: float, tau_syn: float) -> jnp.ndarray:
    """Reproduce the PyTorch filter-kernel construction.

    syn = exp(-t/tau_syn), mem = exp(-t/tau_mem)
    padded_syn = [0]*K ++ syn
    kernel = conv1d(padded_syn, flip(mem))[..., :-1]  ==  [0] ++ (syn (*) mem)[:K-1]
    Conv1d's weight is flip(kernel); cross-correlating with the flipped kernel is
    the causal convolution y[t] = sum_j kernel[j] * x[t-j], so return the causal
    taps directly.
    """
    t = jnp.arange(kernel_size, dtype=jnp.float32)
    syn = jnp.exp(-t / tau_syn)
    mem = jnp.exp(-t / tau_mem)
    full = jnp.convolve(syn, mem)  # full[n] = sum_m syn[m] * mem[n - m]
    return jnp.concatenate(
        [jnp.zeros((1,), jnp.float32), full[: kernel_size - 1]]
    )  # (K,)


# ---------------------------------------------------------------------------
# Tiling helpers
# ---------------------------------------------------------------------------
def _choose_tile(dim: int, unit: int, max_tile: int):
    """Return (tile, padded_dim).

    Prefers (a) a single full-axis block (always legal) for small dims, then
    (b) the largest tile <= max_tile that is a multiple of `unit` and divides
    `dim` exactly (zero-copy), else (c) tile = max aligned tile and the dim is
    zero-padded up to the next tile multiple by the wrapper.
    """
    if dim <= max_tile:
        return dim, dim
    cap = (max_tile // unit) * unit
    t = cap
    while t >= unit:
        if dim % t == 0:
            return t, dim
        t -= unit
    return cap, pl.cdiv(dim, cap) * cap


def _build_taps_matrices(taps_scaled: jnp.ndarray, tt: int, hp: int):
    """Static (scale-folded) FIR matrices.

    w_main[i, t] = taps[t - i]        for 0 <= t - i < K   (intra time tile)
    w_hist[p, t] = taps[t + hp - p]   for 0 <= t+hp-p < K  (carried history cols)
    so that  out_tile = x_tile @ w_main + hist @ w_hist.
    """
    K = taps_scaled.shape[0]
    t_idx = jnp.arange(tt)[None, :]

    i_idx = jnp.arange(tt)[:, None]
    d_main = t_idx - i_idx
    w_main = jnp.where((d_main >= 0) & (d_main < K),
                       taps_scaled[jnp.clip(d_main, 0, K - 1)],
                       0.0).astype(jnp.float32)

    p_idx = jnp.arange(hp)[:, None]
    d_hist = t_idx + hp - p_idx
    w_hist = jnp.where((d_hist >= 0) & (d_hist < K),
                       taps_scaled[jnp.clip(d_hist, 0, K - 1)],
                       0.0).astype(jnp.float32)
    return w_main, w_hist


# ---------------------------------------------------------------------------
# Pallas kernel: one (row-tile, time-tile) step of the depthwise causal FIR
# ---------------------------------------------------------------------------
def _lpf_fir_kernel(x_ref, w_main_ref, w_hist_ref, out_ref, hist_ref, *, tt, hp):
    """
    x_ref:      (TM, TT) current input tile               (auto-pipelined VMEM)
    w_main_ref: (TT, TT) banded Toeplitz taps matrix      (constant block, stays resident)
    w_hist_ref: (HP, TT) taps matrix for carried history  (constant block)
    out_ref:    (TM, TT) output tile
    hist_ref:   (TM, HP) VMEM scratch: last HP time samples of the previous time
                tile of this row tile (zeros on the first time tile, which
                reproduces the module's fresh all-zero `past_inputs`).
    """
    ti = pl.program_id(1)
    n_t = pl.num_programs(1)

    @pl.when(ti == 0)
    def _():
        hist_ref[...] = jnp.zeros_like(hist_ref)

    xf = x_ref[...].astype(jnp.float32)  # single cast per tile (no-op for f32)

    # Intra-tile causal FIR: one MXU matmul against the static banded matrix.
    acc = jnp.dot(xf, w_main_ref[...],
                  precision=jax.lax.Precision.HIGHEST,
                  preferred_element_type=jnp.float32)
    # Cross-tile boundary: tiny matmul against the carried history.
    acc = acc + jnp.dot(hist_ref[...], w_hist_ref[...],
                        precision=jax.lax.Precision.HIGHEST,
                        preferred_element_type=jnp.float32)
    out_ref[...] = acc.astype(out_ref.dtype)

    # Carry the last HP time samples into the next time tile of this row tile
    # (skipped on the last time tile: it would never be read).
    @pl.when(ti + 1 < n_t)
    def _():
        hist_ref[...] = xf[:, tt - hp:]


# ---------------------------------------------------------------------------
# Wrapper
# ---------------------------------------------------------------------------
def lpf_online_forward(x, taps, scale, *, max_row_tile=2048, max_time_tile=128):
    """Single forward pass of LPFOnline with a fresh (all-zero) past_inputs state.

    x:     (B, ..., T) float32/bfloat16 (NCW-like: time is the last axis)
    taps:  (K,) float32 causal filter taps (see build_lpf_taps)
    scale: scalar float32 (the module's scale_factor parameter)
    """
    orig_shape = x.shape
    B, T = x.shape[0], x.shape[-1]
    x2 = x.reshape(B, -1, T)                    # x.reshape(x.shape[0], -1, x.shape[-1])
    BC = x2.shape[0] * x2.shape[1]
    x2 = x2.reshape(BC, T)

    K = int(taps.shape[0])
    pad = K - 1

    tm, BCp = _choose_tile(BC, 8, max_row_tile)    # sublane axis: multiple of 8 (or full)
    tt, Tp = _choose_tile(T, 128, max_time_tile)   # lane axis: multiple of 128 (or full)
    # The carried history only spans one previous time tile; if the filter were
    # longer than a tile, fall back to a single whole-axis time tile.
    if tt != Tp and pad >= tt:
        tt, Tp = T, T
    # Carried-history width: pad rounded up to a sublane multiple, clamped to tt
    # (when there is a single time tile the history stays all-zero).
    hp = min(max(((pad + 7) // 8) * 8, 8), tt)

    # Ragged shapes only: zero-pad up to a tile multiple (trailing zeros on the
    # causal time axis do not change the first T outputs). Divisible shapes
    # take the zero-copy path.
    if (BCp, Tp) != (BC, T):
        x2 = jnp.pad(x2, ((0, BCp - BC), (0, Tp - T)))

    taps_scaled = taps.astype(jnp.float32) * jnp.asarray(scale, jnp.float32)
    w_main, w_hist = _build_taps_matrices(taps_scaled, tt, hp)

    grid = (BCp // tm, Tp // tt)                # rows outer, time innermost (carried)

    out = pl.pallas_call(
        functools.partial(_lpf_fir_kernel, tt=tt, hp=hp),
        out_shape=jax.ShapeDtypeStruct((BCp, Tp), x.dtype),
        grid_spec=pltpu.PrefetchScalarGridSpec(
            num_scalar_prefetch=0,
            grid=grid,
            in_specs=[
                pl.BlockSpec((tm, tt), lambda ri, ti: (ri, ti)),   # x tile
                pl.BlockSpec((tt, tt), lambda ri, ti: (0, 0)),     # banded taps matrix
                pl.BlockSpec((hp, tt), lambda ri, ti: (0, 0)),     # history taps matrix
            ],
            out_specs=pl.BlockSpec((tm, tt), lambda ri, ti: (ri, ti)),
            scratch_shapes=[pltpu.VMEM((tm, hp), jnp.float32)],    # carried history
        ),
        compiler_params=pltpu.CompilerParams(
            dimension_semantics=("parallel", "arbitrary"),
            vmem_limit_bytes=32 * 1024 * 1024,
        ),
    )(x2, w_main, w_hist)

    if (BCp, Tp) != (BC, T):
        out = out[:BC, :T]

    # TODO(synk): the module's stateful `past_inputs` update (shift_past_inputs
    # side effect) is not carried; streaming callers must thread x[..., -pad:]
    # into the next call's history themselves.
    return out.reshape(orig_shape)


# ---------------------------------------------------------------------------
# Demo / self-test
# ---------------------------------------------------------------------------
if __name__ == "__main__":
    kernel_size = 8
    tau_mem, tau_syn = 10.0, 5.0
    initial_scale = 1.5  # scale_factor parameter (deterministic init)

    taps = build_lpf_taps(kernel_size, tau_mem, tau_syn)
    scale = jnp.float32(initial_scale)

    def reference(x):
        T = x.shape[-1]
        rows = x.reshape(-1, T)
        ref_row = lambda r: jnp.convolve(r, taps)[:T]   # causal conv, zero history
        return (jax.vmap(ref_row)(rows) * scale).reshape(x.shape)

    key = jax.random.PRNGKey(0)

    # Small shape from the module interface: (batch=2, channels=4, time=16).
    x_small = jax.random.normal(key, (2, 4, 16), dtype=jnp.float32)
    y_small = jax.block_until_ready(lpf_online_forward(x_small, taps, scale))
    assert y_small.shape == x_small.shape and y_small.dtype == x_small.dtype
    assert jnp.allclose(y_small, reference(x_small), atol=1e-4, rtol=1e-4)

    # Time-tiled / history-carry path (T=512 -> 4 time tiles of 128 with the
    # last-7-sample carry between them).
    x_tiled = jax.random.normal(jax.random.PRNGKey(0), (2, 8, 512), dtype=jnp.float32)
    y_tiled = jax.block_until_ready(lpf_online_forward(x_tiled, taps, scale))
    assert y_tiled.shape == x_tiled.shape
    assert jnp.allclose(y_tiled, reference(x_tiled), atol=1e-4, rtol=1e-4)

    # Ragged time axis (T=200 -> padded to 256, 2 time tiles, output re-sliced).
    x_ragged = jax.random.normal(jax.random.PRNGKey(1), (2, 4, 200), dtype=jnp.float32)
    y_ragged = jax.block_until_ready(lpf_online_forward(x_ragged, taps, scale))
    assert y_ragged.shape == x_ragged.shape
    assert jnp.allclose(y_ragged, reference(x_ragged), atol=1e-4, rtol=1e-4)

    print("KERNEL_OK")
</pallas_src>

<mosaic_0001>
module attributes {stable_mosaic.version = 11 : i64} {
  func.func @_lpf_fir_kernel(%arg0: i32, %arg1: i32, %arg2: memref<8x16xf32, #tpu.memory_space<vmem>>, %arg3: memref<16x16xf32, #tpu.memory_space<vmem>>, %arg4: memref<8x16xf32, #tpu.memory_space<vmem>>, %arg5: memref<8x16xf32, #tpu.memory_space<vmem>>, %arg6: memref<8x8xf32, #tpu.memory_space<vmem>>) attributes {dimension_semantics = [#tpu.dimension_semantics<parallel>, #tpu.dimension_semantics<arbitrary>], iteration_bounds = array<i64: 1, 1>, scalar_prefetch = 0 : i64, scratch_operands = 1 : i64, tpu.core_type = #tpu.core_type<tc>, window_params = [{transform_indices = @transform_0, window_bounds = array<i64: 8, 16>}, {pipeline_mode = #tpu.pipeline_mode<synchronous>, transform_indices = @transform_1, window_bounds = array<i64: 16, 16>}, {pipeline_mode = #tpu.pipeline_mode<synchronous>, transform_indices = @transform_2, window_bounds = array<i64: 8, 16>}, {transform_indices = @transform_3, window_bounds = array<i64: 8, 16>}]} {
    %c0_i32 = arith.constant 0 : i32
    %0 = arith.cmpi eq, %arg1, %c0_i32 : i32
    %1 = arith.extui %0 : i1 to i32
    %c0_i32_0 = arith.constant 0 : i32
    %2 = arith.cmpi ne, %1, %c0_i32_0 : i32
    scf.if %2 {
      %cst_13 = arith.constant 0.000000e+00 : f32
      %15 = vector.broadcast %cst_13 : f32 to vector<8x8xf32>
      %c0_14 = arith.constant 0 : index
      %c0_15 = arith.constant 0 : index
      %16 = vector.load %arg6[%c0_14, %c0_15] : memref<8x8xf32, #tpu.memory_space<vmem>>, vector<8x8xf32>
      tpu.vector_store %arg6[%c0_14, %c0_15], %15 {strides = array<i32>} : memref<8x8xf32, #tpu.memory_space<vmem>>, vector<8x8xf32>,
    } else {
    }
    %c0 = arith.constant 0 : index
    %c0_1 = arith.constant 0 : index
    %3 = vector.load %arg2[%c0, %c0_1] : memref<8x16xf32, #tpu.memory_space<vmem>>, vector<8x16xf32>
    %c0_2 = arith.constant 0 : index
    %c0_3 = arith.constant 0 : index
    %4 = vector.load %arg3[%c0_2, %c0_3] : memref<16x16xf32, #tpu.memory_space<vmem>>, vector<16x16xf32>
    %cst = arith.constant dense<0.000000e+00> : vector<8x16xf32>
    %5 = tpu.matmul %3, %4, %cst {dimension_numbers = #tpu.dot_dimension_numbers<[1], [0], [0], [1], [0, 0, 1, 1], [], []>, precision = #tpu.contract_precision<fp32>} : vector<8x16xf32>, vector<16x16xf32>, vector<8x16xf32> -> vector<8x16xf32>
    %c0_4 = arith.constant 0 : index
    %c0_5 = arith.constant 0 : index
    %6 = vector.load %arg6[%c0_4, %c0_5] : memref<8x8xf32, #tpu.memory_space<vmem>>, vector<8x8xf32>
    %c0_6 = arith.constant 0 : index
    %c0_7 = arith.constant 0 : index
    %7 = vector.load %arg4[%c0_6, %c0_7] : memref<8x16xf32, #tpu.memory_space<vmem>>, vector<8x16xf32>
    %cst_8 = arith.constant dense<0.000000e+00> : vector<8x16xf32>
    %8 = tpu.matmul %6, %7, %cst_8 {dimension_numbers = #tpu.dot_dimension_numbers<[1], [0], [0], [1], [0, 0, 1, 1], [], []>, precision = #tpu.contract_precision<fp32>} : vector<8x8xf32>, vector<8x16xf32>, vector<8x16xf32> -> vector<8x16xf32>
    %9 = arith.addf %5, %8 : vector<8x16xf32>
    %c0_9 = arith.constant 0 : index
    %c0_10 = arith.constant 0 : index
    %10 = vector.load %arg5[%c0_9, %c0_10] : memref<8x16xf32, #tpu.memory_space<vmem>>, vector<8x16xf32>
    tpu.vector_store %arg5[%c0_9, %c0_10], %9 {strides = array<i32>} : memref<8x16xf32, #tpu.memory_space<vmem>>, vector<8x16xf32>,
    %c1_i32 = arith.constant 1 : i32
    %11 = arith.addi %arg1, %c1_i32 : i32
    %c1_i32_11 = arith.constant 1 : i32
    %12 = arith.cmpi slt, %11, %c1_i32_11 : i32
    %13 = arith.extui %12 : i1 to i32
    %c0_i32_12 = arith.constant 0 : i32
    %14 = arith.cmpi ne, %13, %c0_i32_12 : i32
    scf.if %14 {
      %15 = vector.extract_strided_slice %3 {offsets = [0, 8], sizes = [8, 8], strides = [1, 1]} : vector<8x16xf32> to vector<8x8xf32>
      %c0_13 = arith.constant 0 : index
      %c0_14 = arith.constant 0 : index
      %16 = vector.load %arg6[%c0_13, %c0_14] : memref<8x8xf32, #tpu.memory_space<vmem>>, vector<8x8xf32>
      tpu.vector_store %arg6[%c0_13, %c0_14], %15 {strides = array<i32>} : memref<8x8xf32, #tpu.memory_space<vmem>>, vector<8x8xf32>,
    } else {
    }
    return
  }
  func.func @transform_0(%arg0: i32, %arg1: i32) -> (i32, i32) {
    %c0_i32 = arith.constant 0 : i32
    return %arg0, %arg1 : i32, i32
  }
  func.func @transform_1(%arg0: i32, %arg1: i32) -> (i32, i32) {
    %c0_i32 = arith.constant 0 : i32
    %c0_i32_0 = arith.constant 0 : i32
    %c0_i32_1 = arith.constant 0 : i32
    return %c0_i32, %c0_i32_0 : i32, i32
  }
  func.func @transform_2(%arg0: i32, %arg1: i32) -> (i32, i32) {
    %c0_i32 = arith.constant 0 : i32
    %c0_i32_0 = arith.constant 0 : i32
    %c0_i32_1 = arith.constant 0 : i32
    return %c0_i32, %c0_i32_0 : i32, i32
  }
  func.func @transform_3(%arg0: i32, %arg1: i32) -> (i32, i32) {
    %c0_i32 = arith.constant 0 : i32
    return %arg0, %arg1 : i32, i32
  }
}

</mosaic_0001>

<llo_original>
// kernel: tpu_custom_call.1
$region0: #{tpu_custom_call.1}
  #allocation0 [shape = 'u32[]', space=smem, size = 0x4, offset = 0x4, fixed_abs, tag = 'smem constant byte address 0x4 - core index']
  #allocation1 [shape = 'u32[144,128]{1,0:T(1,128)}', space=vmem, size = 0x12000, scoped, tag = 'internal scratch']
  #allocation2 [shape = 'f32[8,8]{1,0:T(8,128)}', space=vmem, size = 0x1000, scoped, tag = 'scratch operand']
  %s0 = inlined_call_operand.hbm [shape: f32[8,16], index: 0, kind: input, shape index: {}]
  %s1 = inlined_call_operand.hbm [shape: f32[16,16], index: 1, kind: input, shape index: {}]
  %s2 = inlined_call_operand.hbm [shape: f32[8,16], index: 2, kind: input, shape index: {}]
  %s3 = inlined_call_operand.hbm [shape: f32[8,16], index: 3, kind: output, shape index: {}]
  %s4 = sld [smem:[#allocation0]]
  $region42: #{tpu_custom_call.1} parent=0
    _
  %s6 = ssub.s32 1, %s4
  %s7 = scalar_select 0, %s6, %s4
  $region1: #{tpu_custom_call.1} parent=0
    #allocation3 [shape = 'u8[4096]{0}', space=vmem, size = 0x1000, scoped, tag = 'input window, operand 0, single buffered']
    #allocation4 [shape = 's32[1]{0}', space=sflag, size = 0x4, scoped, tag = 'scoped memory for tpu_custom_call.1']
    #allocation5 [shape = 's32[1]{0}', space=sflag, size = 0x4, scoped, tag = 'scoped memory for tpu_custom_call.1']
    #allocation6 [shape = 'u8[8192]{0}', space=vmem, size = 0x2000, scoped, tag = 'input window, operand 1, single buffered']
    #allocation7 [shape = 's32[1]{0}', space=sflag, size = 0x4, scoped, tag = 'scoped memory for tpu_custom_call.1']
    #allocation8 [shape = 'u8[4096]{0}', space=vmem, size = 0x1000, scoped, tag = 'input window, operand 2, single buffered']
    #allocation9 [shape = 'u8[4096]{0}', space=vmem, size = 0x1000, scoped, tag = 'output window, operand 0, single buffered']
    %8 = vsyncpa [#allocation4], 0
    %9 = vsyncpa [#allocation7], 0
    %10 = vsyncpa [#allocation5], 0
    // Predicated region
    $region2: #{tpu_custom_call.1} parent=1 // pred_check
      _
    $region3: #{tpu_custom_call.1} parent=1 // pred_check_branch
      %12 = sbr.rel (0) target = $region5
    $region4: #{tpu_custom_call.1} parent=1 // pred_region
      %s14 = ssub.s32 128, 128
      %15 = vsyncadd [#allocation4], %s14
      %s17 = sshll.u32 [#allocation3], 4
      %s18 = int_to_ptr.vmem [resolvable:$true] %s17
      %20 = dma.hbm_to_vmem [thread:$0]  %s0, 128, %s18, [#allocation4]
    $region5: #{tpu_custom_call.1} parent=1 // pred_fallthru
      _
    // Predicated region
    $region6: #{tpu_custom_call.1} parent=1 // pred_check
      _
    $region7: #{tpu_custom_call.1} parent=1 // pred_check_branch
      %22 = sbr.rel (0) target = $region9
    $region8: #{tpu_custom_call.1} parent=1 // pred_region
      %s24 = ssub.s32 256, 256
      %25 = vsyncadd [#allocation7], %s24
      %s26 = sshll.u32 [#allocation6], 4
      %s27 = int_to_ptr.vmem [resolvable:$true] %s26
      %32 = dma.hbm_to_vmem [thread:$0]  %s1, 256, %s27, [#allocation7], 128, 128, 8
    $region9: #{tpu_custom_call.1} parent=1 // pred_fallthru
      _
    // Predicated region
    $region10: #{tpu_custom_call.1} parent=1 // pred_check
      _
    $region11: #{tpu_custom_call.1} parent=1 // pred_check_branch
      %34 = sbr.rel (0) target = $region13
    $region12: #{tpu_custom_call.1} parent=1 // pred_region
      %s36 = ssub.s32 128, 128
      %37 = vsyncadd [#allocation7], %s36
      %s39 = sshll.u32 [#allocation8], 4
      %s40 = int_to_ptr.vmem [resolvable:$true] %s39
      %42 = dma.hbm_to_vmem [thread:$0]  %s2, 128, %s40, [#allocation7]
    $region13: #{tpu_custom_call.1} parent=1 // pred_fallthru
      _
    // Predicated region
    $region14: #{tpu_custom_call.1} parent=1 // pred_check
      _
    $region15: #{tpu_custom_call.1} parent=1 // pred_check_branch
      %44 = sbr.rel (0) target = $region17
    $region16: #{tpu_custom_call.1} parent=1 // pred_region
      %45 = dma.done [#allocation4], 128
    $region17: #{tpu_custom_call.1} parent=1 // pred_fallthru
      _
    // Predicated region
    $region18: #{tpu_custom_call.1} parent=1 // pred_check
      _
    $region19: #{tpu_custom_call.1} parent=1 // pred_check_branch
      %47 = sbr.rel (0) target = $region21
    $region20: #{tpu_custom_call.1} parent=1 // pred_region
      %48 = dma.done [#allocation7], 256
    $region21: #{tpu_custom_call.1} parent=1 // pred_fallthru
      _
    // Predicated region
    $region22: #{tpu_custom_call.1} parent=1 // pred_check
      _
    $region23: #{tpu_custom_call.1} parent=1 // pred_check_branch
      %50 = sbr.rel (0) target = $region25
    $region24: #{tpu_custom_call.1} parent=1 // pred_region
      %51 = dma.done [#allocation7], 128
    $region25: #{tpu_custom_call.1} parent=1 // pred_fallthru
      _
    %p52 = scmp.eq.s32.totalorder 0, 0
    // Predicated region
    $region26: #{tpu_custom_call.1} parent=1 // pred_check
      %p53 = pneg %p52
    $region27: #{tpu_custom_call.1} parent=1 // pred_check_branch
      %55 = sbr.rel (%p53) target = $region29
    $region28: #{tpu_custom_call.1} parent=1 // pred_region
      %vm56 = vcmask 64512
      %57 = vst.msk [vmem:[#allocation2] sm:$0xff] %vm56, 0.0
    $region29: #{tpu_custom_call.1} parent=1 // pred_fallthru
      _
    %v58 = vld [vmem:[#allocation3] sm:$0xff]
    %v59 = vld [vmem:[#allocation6] sm:$0xff]
    %v60 = vld [vmem:[#allocation6 + $0x8] sm:$0xff]
    %v61 = vld [vmem:[#allocation2] sm:$0xff]
    %v62 = vld [vmem:[#allocation8] sm:$0xff]
    %vm63 = vcmask 64512
    %v65 = vsel %vm63, %v61, 0
    %67 = vmatprep.subr.mxu0 0.0
    %68 = vmatpush1.msra.mxu0 0.0
    %69 = vmatprep.subr.mxu0 0.0
    %70 = vmatpush1.msra.mxu0 0.0
    %71 = vmatprep.subr.mxu0 0.0
    %72 = vmatpush1.msra.mxu0 0.0
    %73 = vmatprep.subr.mxu0 0.0
    %74 = vmatpush1.msra.mxu0 0.0
    %75 = vmatprep.subr.mxu0 0.0
    %76 = vmatpush1.msra.mxu0 0.0
    %77 = vmatprep.subr.mxu0 0.0
    %78 = vmatpush1.msra.mxu0 0.0
    %79 = vmatprep.subr.mxu0 0.0
    %80 = vmatpush1.msra.mxu0 0.0
    %81 = vmatprep.subr.mxu0 0.0
    %82 = vmatpush1.msra.mxu0 0.0
    %83 = vmatprep.subr.mxu0 0.0
    %84 = vmatpush1.msra.mxu0 0.0
    %85 = vmatprep.subr.mxu0 0.0
    %86 = vmatpush1.msra.mxu0 0.0
    %87 = vmatprep.subr.mxu0 0.0
    %88 = vmatpush1.msra.mxu0 0.0
    %89 = vmatprep.subr.mxu0 0.0
    %90 = vmatpush1.msra.mxu0 0.0
    %91 = vmatprep.subr.mxu0 0.0
    %92 = vmatpush1.msra.mxu0 0.0
    %93 = vmatprep.subr.mxu0 0.0
    %94 = vmatpush1.msra.mxu0 0.0
    %95 = vmatprep.subr.mxu0 0.0
    %96 = vmatpush1.msra.mxu0 0.0
    %97 = vmatprep.subr.mxu0 0.0
    %v98 = vand.u32 %v62, 4294901760
    %99 = vmatpush1.msra.mxu0 %v98
    %100 = vmatprep.subr.mxu0 0.0
    %101 = vmatpush2.msra.mxu0 0.0
    %102 = vmatprep.subr.mxu0 0.0
    %103 = vmatpush2.msra.mxu0 0.0
    %104 = vmatprep.subr.mxu0 0.0
    %105 = vmatpush2.msra.mxu0 0.0
    %106 = vmatprep.subr.mxu0 0.0
    %107 = vmatpush2.msra.mxu0 0.0
    %108 = vmatprep.subr.mxu0 0.0
    %109 = vmatpush2.msra.mxu0 0.0
    %110 = vmatprep.subr.mxu0 0.0
    %111 = vmatpush2.msra.mxu0 0.0
    %112 = vmatprep.subr.mxu0 0.0
    %113 = vmatpush2.msra.mxu0 0.0
    %114 = vmatprep.subr.mxu0 0.0
    %115 = vmatpush2.msra.mxu0 0.0
    %116 = vmatprep.subr.mxu0 0.0
    %117 = vmatpush2.msra.mxu0 0.0
    %118 = vmatprep.subr.mxu0 0.0
    %119 = vmatpush2.msra.mxu0 0.0
    %120 = vmatprep.subr.mxu0 0.0
    %121 = vmatpush2.msra.mxu0 0.0
    %122 = vmatprep.subr.mxu0 0.0
    %123 = vmatpush2.msra.mxu0 0.0
    %124 = vmatprep.subr.mxu0 0.0
    %125 = vmatpush2.msra.mxu0 0.0
    %126 = vmatprep.subr.mxu0 0.0
    %127 = vmatpush2.msra.mxu0 0.0
    %128 = vmatprep.subr.mxu0 0.0
    %129 = vmatpush2.msra.mxu0 0.0
    %130 = vmatprep.subr.mxu0 0.0
    %131 = vmatpush2.msra.mxu0 0.0
    %132 = vmatprep.mubr.f32.mxu0 0.0
    %v133 = vand.u32 %v65, 4294901760
    %v134 = vsub.f32 %v65, %v133
    %v135 = vand.u32 %v134, 4294901760
    %v136 = vsub.f32 %v134, %v135
    %v137 = vand.u32 %v136, 4294901760
    %138 = vmatmul.mubr.f32.gmra.mxu0 %v137
    %v139 = vpop.f32.mrf.mxu0
    %v140 = vadd.f32 0.0, %v139
    %v141 = vpop.f32.mrf.mxu0
    %142 = vdwg.mxu0
    %143 = vmatprep.subr.mxu0 0.0
    %144 = vmatpush1.msra.mxu0 0.0
    %145 = vmatprep.subr.mxu0 0.0
    %146 = vmatpush1.msra.mxu0 0.0
    %147 = vmatprep.subr.mxu0 0.0
    %148 = vmatpush1.msra.mxu0 0.0
    %149 = vmatprep.subr.mxu0 0.0
    %150 = vmatpush1.msra.mxu0 0.0
    %151 = vmatprep.subr.mxu0 0.0
    %152 = vmatpush1.msra.mxu0 0.0
    %153 = vmatprep.subr.mxu0 0.0
    %154 = vmatpush1.msra.mxu0 0.0
    %155 = vmatprep.subr.mxu0 0.0
    %156 = vmatpush1.msra.mxu0 0.0
    %157 = vmatprep.subr.mxu0 0.0
    %158 = vmatpush1.msra.mxu0 0.0
    %159 = vmatprep.subr.mxu0 0.0
    %160 = vmatpush1.msra.mxu0 0.0
    %161 = vmatprep.subr.mxu0 0.0
    %162 = vmatpush1.msra.mxu0 0.0
    %163 = vmatprep.subr.mxu0 0.0
    %164 = vmatpush1.msra.mxu0 0.0
    %165 = vmatprep.subr.mxu0 0.0
    %166 = vmatpush1.msra.mxu0 0.0
    %167 = vmatprep.subr.mxu0 0.0
    %168 = vmatpush1.msra.mxu0 0.0
    %169 = vmatprep.subr.mxu0 0.0
    %170 = vmatpush1.msra.mxu0 0.0
    %171 = vmatprep.subr.mxu0 0.0
    %172 = vmatpush1.msra.mxu0 0.0
    %173 = vmatprep.subr.mxu0 0.0
    %v174 = vand.u32 %v62, 4294901760
    %v175 = vsub.f32 %v62, %v174
    %v176 = vand.u32 %v175, 4294901760
    %v177 = vsub.f32 %v175, %v176
    %v178 = vand.u32 %v177, 4294901760
    %179 = vmatpush1.msra.mxu0 %v178
    %180 = vmatprep.subr.mxu0 0.0
    %181 = vmatpush2.msra.mxu0 0.0
    %182 = vmatprep.subr.mxu0 0.0
    %183 = vmatpush2.msra.mxu0 0.0
    %184 = vmatprep.subr.mxu0 0.0
    %185 = vmatpush2.msra.mxu0 0.0
    %186 = vmatprep.subr.mxu0 0.0
    %187 = vmatpush2.msra.mxu0 0.0
    %188 = vmatprep.subr.mxu0 0.0
    %189 = vmatpush2.msra.mxu0 0.0
    %190 = vmatprep.subr.mxu0 0.0
    %191 = vmatpush2.msra.mxu0 0.0
    %192 = vmatprep.subr.mxu0 0.0
    %193 = vmatpush2.msra.mxu0 0.0
    %194 = vmatprep.subr.mxu0 0.0
    %195 = vmatpush2.msra.mxu0 0.0
    %196 = vmatprep.subr.mxu0 0.0
    %197 = vmatpush2.msra.mxu0 0.0
    %198 = vmatprep.subr.mxu0 0.0
    %199 = vmatpush2.msra.mxu0 0.0
    %200 = vmatprep.subr.mxu0 0.0
    %201 = vmatpush2.msra.mxu0 0.0
    %202 = vmatprep.subr.mxu0 0.0
    %203 = vmatpush2.msra.mxu0 0.0
    %204 = vmatprep.subr.mxu0 0.0
    %205 = vmatpush2.msra.mxu0 0.0
    %206 = vmatprep.subr.mxu0 0.0
    %207 = vmatpush2.msra.mxu0 0.0
    %208 = vmatprep.subr.mxu0 0.0
    %209 = vmatpush2.msra.mxu0 0.0
    %210 = vmatprep.subr.mxu0 0.0
    %211 = vmatpush2.msra.mxu0 0.0
    %212 = vmatprep.mubr.f32.mxu0 0.0
    %v213 = vand.u32 %v65, 4294901760
    %214 = vmatmul.mubr.f32.gmra.mxu0 %v213
    %v215 = vpop.f32.mrf.mxu0
    %v216 = vadd.f32 %v140, %v215
    %v217 = vpop.f32.mrf.mxu0
    %218 = vdwg.mxu0
    %219 = vmatprep.subr.mxu0 0.0
    %220 = vmatpush1.msra.mxu0 0.0
    %221 = vmatprep.subr.mxu0 0.0
    %222 = vmatpush1.msra.mxu0 0.0
    %223 = vmatprep.subr.mxu0 0.0
    %224 = vmatpush1.msra.mxu0 0.0
    %225 = vmatprep.subr.mxu0 0.0
    %226 = vmatpush1.msra.mxu0 0.0
    %227 = vmatprep.subr.mxu0 0.0
    %228 = vmatpush1.msra.mxu0 0.0
    %229 = vmatprep.subr.mxu0 0.0
    %230 = vmatpush1.msra.mxu0 0.0
    %231 = vmatprep.subr.mxu0 0.0
    %232 = vmatpush1.msra.mxu0 0.0
    %233 = vmatprep.subr.mxu0 0.0
    %234 = vmatpush1.msra.mxu0 0.0
    %235 = vmatprep.subr.mxu0 0.0
    %236 = vmatpush1.msra.mxu0 0.0
    %237 = vmatprep.subr.mxu0 0.0
    %238 = vmatpush1.msra.mxu0 0.0
    %239 = vmatprep.subr.mxu0 0.0
    %240 = vmatpush1.msra.mxu0 0.0
    %241 = vmatprep.subr.mxu0 0.0
    %242 = vmatpush1.msra.mxu0 0.0
    %243 = vmatprep.subr.mxu0 0.0
    %244 = vmatpush1.msra.mxu0 0.0
    %245 = vmatprep.subr.mxu0 0.0
    %246 = vmatpush1.msra.mxu0 0.0
    %247 = vmatprep.subr.mxu0 0.0
    %248 = vmatpush1.msra.mxu0 0.0
    %249 = vmatprep.subr.mxu0 0.0
    %v250 = vand.u32 %v62, 4294901760
    %v251 = vsub.f32 %v62, %v250
    %252 = vmatpush1.msra.mxu0 %v251
    %253 = vmatprep.subr.mxu0 0.0
    %254 = vmatpush2.msra.mxu0 0.0
    %255 = vmatprep.subr.mxu0 0.0
    %256 = vmatpush2.msra.mxu0 0.0
    %257 = vmatprep.subr.mxu0 0.0
    %258 = vmatpush2.msra.mxu0 0.0
    %259 = vmatprep.subr.mxu0 0.0
    %260 = vmatpush2.msra.mxu0 0.0
    %261 = vmatprep.subr.mxu0 0.0
    %262 = vmatpush2.msra.mxu0 0.0
    %263 = vmatprep.subr.mxu0 0.0
    %264 = vmatpush2.msra.mxu0 0.0
    %265 = vmatprep.subr.mxu0 0.0
    %266 = vmatpush2.msra.mxu0 0.0
    %267 = vmatprep.subr.mxu0 0.0
    %268 = vmatpush2.msra.mxu0 0.0
    %269 = vmatprep.subr.mxu0 0.0
    %270 = vmatpush2.msra.mxu0 0.0
    %271 = vmatprep.subr.mxu0 0.0
    %272 = vmatpush2.msra.mxu0 0.0
    %273 = vmatprep.subr.mxu0 0.0
    %274 = vmatpush2.msra.mxu0 0.0
    %275 = vmatprep.subr.mxu0 0.0
    %276 = vmatpush2.msra.mxu0 0.0
    %277 = vmatprep.subr.mxu0 0.0
    %278 = vmatpush2.msra.mxu0 0.0
    %279 = vmatprep.subr.mxu0 0.0
    %280 = vmatpush2.msra.mxu0 0.0
    %281 = vmatprep.subr.mxu0 0.0
    %282 = vmatpush2.msra.mxu0 0.0
    %283 = vmatprep.subr.mxu0 0.0
    %284 = vmatpush2.msra.mxu0 0.0
    %285 = vmatprep.mubr.f32.mxu0 0.0
    %v286 = vand.u32 %v65, 4294901760
    %v287 = vsub.f32 %v65, %v286
    %288 = vmatmul.mubr.f32.gmra.mxu0 %v287
    %v289 = vpop.f32.mrf.mxu0
    %v290 = vadd.f32 %v216, %v289
    %v291 = vpop.f32.mrf.mxu0
    %292 = vdwg.mxu0
    %293 = vmatprep.subr.mxu0 0.0
    %294 = vmatpush1.msra.mxu0 0.0
    %295 = vmatprep.subr.mxu0 0.0
    %296 = vmatpush1.msra.mxu0 0.0
    %297 = vmatprep.subr.mxu0 0.0
    %298 = vmatpush1.msra.mxu0 0.0
    %299 = vmatprep.subr.mxu0 0.0
    %300 = vmatpush1.msra.mxu0 0.0
    %301 = vmatprep.subr.mxu0 0.0
    %302 = vmatpush1.msra.mxu0 0.0
    %303 = vmatprep.subr.mxu0 0.0
    %304 = vmatpush1.msra.mxu0 0.0
    %305 = vmatprep.subr.mxu0 0.0
    %306 = vmatpush1.msra.mxu0 0.0
    %307 = vmatprep.subr.mxu0 0.0
    %308 = vmatpush1.msra.mxu0 0.0
    %309 = vmatprep.subr.mxu0 0.0
    %310 = vmatpush1.msra.mxu0 0.0
    %311 = vmatprep.subr.mxu0 0.0
    %312 = vmatpush1.msra.mxu0 0.0
    %313 = vmatprep.subr.mxu0 0.0
    %314 = vmatpush1.msra.mxu0 0.0
    %315 = vmatprep.subr.mxu0 0.0
    %316 = vmatpush1.msra.mxu0 0.0
    %317 = vmatprep.subr.mxu0 0.0
    %318 = vmatpush1.msra.mxu0 0.0
    %319 = vmatprep.subr.mxu0 0.0
    %320 = vmatpush1.msra.mxu0 0.0
    %321 = vmatprep.subr.mxu0 0.0
    %322 = vmatpush1.msra.mxu0 0.0
    %323 = vmatprep.subr.mxu0 0.0
    %v324 = vand.u32 %v62, 4294901760
    %325 = vmatpush1.msra.mxu0 %v324
    %326 = vmatprep.subr.mxu0 0.0
    %327 = vmatpush2.msra.mxu0 0.0
    %328 = vmatprep.subr.mxu0 0.0
    %329 = vmatpush2.msra.mxu0 0.0
    %330 = vmatprep.subr.mxu0 0.0
    %331 = vmatpush2.msra.mxu0 0.0
    %332 = vmatprep.subr.mxu0 0.0
    %333 = vmatpush2.msra.mxu0 0.0
    %334 = vmatprep.subr.mxu0 0.0
    %335 = vmatpush2.msra.mxu0 0.0
    %336 = vmatprep.subr.mxu0 0.0
    %337 = vmatpush2.msra.mxu0 0.0
    %338 = vmatprep.subr.mxu0 0.0
    %339 = vmatpush2.msra.mxu0 0.0
    %340 = vmatprep.subr.mxu0 0.0
    %341 = vmatpush2.msra.mxu0 0.0
    %342 = vmatprep.subr.mxu0 0.0
    %343 = vmatpush2.msra.mxu0 0.0
    %344 = vmatprep.subr.mxu0 0.0
    %345 = vmatpush2.msra.mxu0 0.0
    %346 = vmatprep.subr.mxu0 0.0
    %347 = vmatpush2.msra.mxu0 0.0
    %348 = vmatprep.subr.mxu0 0.0
    %349 = vmatpush2.msra.mxu0 0.0
    %350 = vmatprep.subr.mxu0 0.0
    %351 = vmatpush2.msra.mxu0 0.0
    %352 = vmatprep.subr.mxu0 0.0
    %353 = vmatpush2.msra.mxu0 0.0
    %354 = vmatprep.subr.mxu0 0.0
    %355 = vmatpush2.msra.mxu0 0.0
    %356 = vmatprep.subr.mxu0 0.0
    %357 = vmatpush2.msra.mxu0 0.0
    %358 = vmatprep.mubr.f32.mxu0 0.0
    %v359 = vand.u32 %v65, 4294901760
    %v360 = vsub.f32 %v65, %v359
    %v361 = vand.u32 %v360, 4294901760
    %362 = vmatmul.mubr.f32.gmra.mxu0 %v361
    %v363 = vpop.f32.mrf.mxu0
    %v364 = vadd.f32 %v290, %v363
    %v365 = vpop.f32.mrf.mxu0
    %366 = vdwg.mxu0
    %367 = vmatprep.subr.mxu0 0.0
    %368 = vmatpush1.msra.mxu0 0.0
    %369 = vmatprep.subr.mxu0 0.0
    %370 = vmatpush1.msra.mxu0 0.0
    %371 = vmatprep.subr.mxu0 0.0
    %372 = vmatpush1.msra.mxu0 0.0
    %373 = vmatprep.subr.mxu0 0.0
    %374 = vmatpush1.msra.mxu0 0.0
    %375 = vmatprep.subr.mxu0 0.0
    %376 = vmatpush1.msra.mxu0 0.0
    %377 = vmatprep.subr.mxu0 0.0
    %378 = vmatpush1.msra.mxu0 0.0
    %379 = vmatprep.subr.mxu0 0.0
    %380 = vmatpush1.msra.mxu0 0.0
    %381 = vmatprep.subr.mxu0 0.0
    %382 = vmatpush1.msra.mxu0 0.0
    %383 = vmatprep.subr.mxu0 0.0
    %384 = vmatpush1.msra.mxu0 0.0
    %385 = vmatprep.subr.mxu0 0.0
    %386 = vmatpush1.msra.mxu0 0.0
    %387 = vmatprep.subr.mxu0 0.0
    %388 = vmatpush1.msra.mxu0 0.0
    %389 = vmatprep.subr.mxu0 0.0
    %390 = vmatpush1.msra.mxu0 0.0
    %391 = vmatprep.subr.mxu0 0.0
    %392 = vmatpush1.msra.mxu0 0.0
    %393 = vmatprep.subr.mxu0 0.0
    %394 = vmatpush1.msra.mxu0 0.0
    %395 = vmatprep.subr.mxu0 0.0
    %396 = vmatpush1.msra.mxu0 0.0
    %397 = vmatprep.subr.mxu0 0.0
    %v398 = vand.u32 %v62, 4294901760
    %v399 = vsub.f32 %v62, %v398
    %v400 = vand.u32 %v399, 4294901760
    %401 = vmatpush1.msra.mxu0 %v400
    %402 = vmatprep.subr.mxu0 0.0
    %403 = vmatpush2.msra.mxu0 0.0
    %404 = vmatprep.subr.mxu0 0.0
    %405 = vmatpush2.msra.mxu0 0.0
    %406 = vmatprep.subr.mxu0 0.0
    %407 = vmatpush2.msra.mxu0 0.0
    %408 = vmatprep.subr.mxu0 0.0
    %409 = vmatpush2.msra.mxu0 0.0
    %410 = vmatprep.subr.mxu0 0.0
    %411 = vmatpush2.msra.mxu0 0.0
    %412 = vmatprep.subr.mxu0 0.0
    %413 = vmatpush2.msra.mxu0 0.0
    %414 = vmatprep.subr.mxu0 0.0
    %415 = vmatpush2.msra.mxu0 0.0
    %416 = vmatprep.subr.mxu0 0.0
    %417 = vmatpush2.msra.mxu0 0.0
    %418 = vmatprep.subr.mxu0 0.0
    %419 = vmatpush2.msra.mxu0 0.0
    %420 = vmatprep.subr.mxu0 0.0
    %421 = vmatpush2.msra.mxu0 0.0
    %422 = vmatprep.subr.mxu0 0.0
    %423 = vmatpush2.msra.mxu0 0.0
    %424 = vmatprep.subr.mxu0 0.0
    %425 = vmatpush2.msra.mxu0 0.0
    %426 = vmatprep.subr.mxu0 0.0
    %427 = vmatpush2.msra.mxu0 0.0
    %428 = vmatprep.subr.mxu0 0.0
    %429 = vmatpush2.msra.mxu0 0.0
    %430 = vmatprep.subr.mxu0 0.0
    %431 = vmatpush2.msra.mxu0 0.0
    %432 = vmatprep.subr.mxu0 0.0
    %433 = vmatpush2.msra.mxu0 0.0
    %434 = vmatprep.mubr.f32.mxu0 0.0
    %v435 = vand.u32 %v65, 4294901760
    %436 = vmatmul.mubr.f32.gmra.mxu0 %v435
    %v437 = vpop.f32.mrf.mxu0
    %v438 = vadd.f32 %v364, %v437
    %v439 = vpop.f32.mrf.mxu0
    %440 = vdwg.mxu0
    %441 = vmatprep.subr.mxu0 0.0
    %442 = vmatpush1.msra.mxu0 0.0
    %443 = vmatprep.subr.mxu0 0.0
    %444 = vmatpush1.msra.mxu0 0.0
    %445 = vmatprep.subr.mxu0 0.0
    %446 = vmatpush1.msra.mxu0 0.0
    %447 = vmatprep.subr.mxu0 0.0
    %448 = vmatpush1.msra.mxu0 0.0
    %449 = vmatprep.subr.mxu0 0.0
    %450 = vmatpush1.msra.mxu0 0.0
    %451 = vmatprep.subr.mxu0 0.0
    %452 = vmatpush1.msra.mxu0 0.0
    %453 = vmatprep.subr.mxu0 0.0
    %454 = vmatpush1.msra.mxu0 0.0
    %455 = vmatprep.subr.mxu0 0.0
    %456 = vmatpush1.msra.mxu0 0.0
    %457 = vmatprep.subr.mxu0 0.0
    %458 = vmatpush1.msra.mxu0 0.0
    %459 = vmatprep.subr.mxu0 0.0
    %460 = vmatpush1.msra.mxu0 0.0
    %461 = vmatprep.subr.mxu0 0.0
    %462 = vmatpush1.msra.mxu0 0.0
    %463 = vmatprep.subr.mxu0 0.0
    %464 = vmatpush1.msra.mxu0 0.0
    %465 = vmatprep.subr.mxu0 0.0
    %466 = vmatpush1.msra.mxu0 0.0
    %467 = vmatprep.subr.mxu0 0.0
    %468 = vmatpush1.msra.mxu0 0.0
    %469 = vmatprep.subr.mxu0 0.0
    %470 = vmatpush1.msra.mxu0 0.0
    %471 = vmatprep.subr.mxu0 0.0
    %v472 = vand.u32 %v62, 4294901760
    %473 = vmatpush1.msra.mxu0 %v472
    %474 = vmatprep.subr.mxu0 0.0
    %475 = vmatpush2.msra.mxu0 0.0
    %476 = vmatprep.subr.mxu0 0.0
    %477 = vmatpush2.msra.mxu0 0.0
    %478 = vmatprep.subr.mxu0 0.0
    %479 = vmatpush2.msra.mxu0 0.0
    %480 = vmatprep.subr.mxu0 0.0
    %481 = vmatpush2.msra.mxu0 0.0
    %482 = vmatprep.subr.mxu0 0.0
    %483 = vmatpush2.msra.mxu0 0.0
    %484 = vmatprep.subr.mxu0 0.0
    %485 = vmatpush2.msra.mxu0 0.0
    %486 = vmatprep.subr.mxu0 0.0
    %487 = vmatpush2.msra.mxu0 0.0
    %488 = vmatprep.subr.mxu0 0.0
    %489 = vmatpush2.msra.mxu0 0.0
    %490 = vmatprep.subr.mxu0 0.0
    %491 = vmatpush2.msra.mxu0 0.0
    %492 = vmatprep.subr.mxu0 0.0
    %493 = vmatpush2.msra.mxu0 0.0
    %494 = vmatprep.subr.mxu0 0.0
    %495 = vmatpush2.msra.mxu0 0.0
    %496 = vmatprep.subr.mxu0 0.0
    %497 = vmatpush2.msra.mxu0 0.0
    %498 = vmatprep.subr.mxu0 0.0
    %499 = vmatpush2.msra.mxu0 0.0
    %500 = vmatprep.subr.mxu0 0.0
    %501 = vmatpush2.msra.mxu0 0.0
    %502 = vmatprep.subr.mxu0 0.0
    %503 = vmatpush2.msra.mxu0 0.0
    %504 = vmatprep.subr.mxu0 0.0
    %505 = vmatpush2.msra.mxu0 0.0
    %506 = vmatprep.mubr.f32.mxu0 0.0
    %v507 = vand.u32 %v65, 4294901760
    %508 = vmatmul.mubr.f32.gmra.mxu0 %v507
    %v509 = vpop.f32.mrf.mxu0
    %v510 = vadd.f32 %v438, %v509
    %v511 = vpop.f32.mrf.mxu0
    %512 = vdwg.mxu0
    %vm513 = vcmask 130048
    %v515 = vsel %vm513, %v58, 0
    %517 = vmatprep.subr.mxu0 0.0
    %518 = vmatpush1.msra.mxu0 0.0
    %519 = vmatprep.subr.mxu0 0.0
    %520 = vmatpush1.msra.mxu0 0.0
    %521 = vmatprep.subr.mxu0 0.0
    %522 = vmatpush1.msra.mxu0 0.0
    %523 = vmatprep.subr.mxu0 0.0
    %524 = vmatpush1.msra.mxu0 0.0
    %525 = vmatprep.subr.mxu0 0.0
    %526 = vmatpush1.msra.mxu0 0.0
    %527 = vmatprep.subr.mxu0 0.0
    %528 = vmatpush1.msra.mxu0 0.0
    %529 = vmatprep.subr.mxu0 0.0
    %530 = vmatpush1.msra.mxu0 0.0
    %531 = vmatprep.subr.mxu0 0.0
    %532 = vmatpush1.msra.mxu0 0.0
    %533 = vmatprep.subr.mxu0 0.0
    %534 = vmatpush1.msra.mxu0 0.0
    %535 = vmatprep.subr.mxu0 0.0
    %536 = vmatpush1.msra.mxu0 0.0
    %537 = vmatprep.subr.mxu0 0.0
    %538 = vmatpush1.msra.mxu0 0.0
    %539 = vmatprep.subr.mxu0 0.0
    %540 = vmatpush1.msra.mxu0 0.0
    %541 = vmatprep.subr.mxu0 0.0
    %542 = vmatpush1.msra.mxu0 0.0
    %543 = vmatprep.subr.mxu0 0.0
    %544 = vmatpush1.msra.mxu0 0.0
    %545 = vmatprep.subr.mxu0 0.0
    %v546 = vand.u32 %v60, 4294901760
    %547 = vmatpush1.msra.mxu0 %v546
    %548 = vmatprep.subr.mxu0 0.0
    %v549 = vand.u32 %v59, 4294901760
    %550 = vmatpush1.msra.mxu0 %v549
    %551 = vmatprep.subr.mxu0 0.0
    %552 = vmatpush2.msra.mxu0 0.0
    %553 = vmatprep.subr.mxu0 0.0
    %554 = vmatpush2.msra.mxu0 0.0
    %555 = vmatprep.subr.mxu0 0.0
    %556 = vmatpush2.msra.mxu0 0.0
    %557 = vmatprep.subr.mxu0 0.0
    %558 = vmatpush2.msra.mxu0 0.0
    %559 = vmatprep.subr.mxu0 0.0
    %560 = vmatpush2.msra.mxu0 0.0
    %561 = vmatprep.subr.mxu0 0.0
    %562 = vmatpush2.msra.mxu0 0.0
    %563 = vmatprep.subr.mxu0 0.0
    %564 = vmatpush2.msra.mxu0 0.0
    %565 = vmatprep.subr.mxu0 0.0
    %566 = vmatpush2.msra.mxu0 0.0
    %567 = vmatprep.subr.mxu0 0.0
    %568 = vmatpush2.msra.mxu0 0.0
    %569 = vmatprep.subr.mxu0 0.0
    %570 = vmatpush2.msra.mxu0 0.0
    %571 = vmatprep.subr.mxu0 0.0
    %572 = vmatpush2.msra.mxu0 0.0
    %573 = vmatprep.subr.mxu0 0.0
    %574 = vmatpush2.msra.mxu0 0.0
    %575 = vmatprep.subr.mxu0 0.0
    %576 = vmatpush2.msra.mxu0 0.0
    %577 = vmatprep.subr.mxu0 0.0
    %578 = vmatpush2.msra.mxu0 0.0
    %579 = vmatprep.subr.mxu0 0.0
    %580 = vmatpush2.msra.mxu0 0.0
    %581 = vmatprep.subr.mxu0 0.0
    %582 = vmatpush2.msra.mxu0 0.0
    %583 = vmatprep.mubr.f32.mxu0 0.0
    %v584 = vand.u32 %v515, 4294901760
    %v585 = vsub.f32 %v515, %v584
    %v586 = vand.u32 %v585, 4294901760
    %v587 = vsub.f32 %v585, %v586
    %v588 = vand.u32 %v587, 4294901760
    %589 = vmatmul.mubr.f32.gmra.mxu0 %v588
    %v590 = vpop.f32.mrf.mxu0
    %v591 = vadd.f32 %v510, %v590
    %v592 = vpop.f32.mrf.mxu0
    %593 = vdwg.mxu0
    %594 = vmatprep.subr.mxu0 0.0
    %595 = vmatpush1.msra.mxu0 0.0
    %596 = vmatprep.subr.mxu0 0.0
    %597 = vmatpush1.msra.mxu0 0.0
    %598 = vmatprep.subr.mxu0 0.0
    %599 = vmatpush1.msra.mxu0 0.0
    %600 = vmatprep.subr.mxu0 0.0
    %601 = vmatpush1.msra.mxu0 0.0
    %602 = vmatprep.subr.mxu0 0.0
    %603 = vmatpush1.msra.mxu0 0.0
    %604 = vmatprep.subr.mxu0 0.0
    %605 = vmatpush1.msra.mxu0 0.0
    %606 = vmatprep.subr.mxu0 0.0
    %607 = vmatpush1.msra.mxu0 0.0
    %608 = vmatprep.subr.mxu0 0.0
    %609 = vmatpush1.msra.mxu0 0.0
    %610 = vmatprep.subr.mxu0 0.0
    %611 = vmatpush1.msra.mxu0 0.0
    %612 = vmatprep.subr.mxu0 0.0
    %613 = vmatpush1.msra.mxu0 0.0
    %614 = vmatprep.subr.mxu0 0.0
    %615 = vmatpush1.msra.mxu0 0.0
    %616 = vmatprep.subr.mxu0 0.0
    %617 = vmatpush1.msra.mxu0 0.0
    %618 = vmatprep.subr.mxu0 0.0
    %619 = vmatpush1.msra.mxu0 0.0
    %620 = vmatprep.subr.mxu0 0.0
    %621 = vmatpush1.msra.mxu0 0.0
    %622 = vmatprep.subr.mxu0 0.0
    %v623 = vand.u32 %v60, 4294901760
    %v624 = vsub.f32 %v60, %v623
    %v625 = vand.u32 %v624, 4294901760
    %v626 = vsub.f32 %v624, %v625
    %v627 = vand.u32 %v626, 4294901760
    %628 = vmatpush1.msra.mxu0 %v627
    %629 = vmatprep.subr.mxu0 0.0
    %v630 = vand.u32 %v59, 4294901760
    %v631 = vsub.f32 %v59, %v630
    %v632 = vand.u32 %v631, 4294901760
    %v633 = vsub.f32 %v631, %v632
    %v634 = vand.u32 %v633, 4294901760
    %635 = vmatpush1.msra.mxu0 %v634
    %636 = vmatprep.subr.mxu0 0.0
    %637 = vmatpush2.msra.mxu0 0.0
    %638 = vmatprep.subr.mxu0 0.0
    %639 = vmatpush2.msra.mxu0 0.0
    %640 = vmatprep.subr.mxu0 0.0
    %641 = vmatpush2.msra.mxu0 0.0
    %642 = vmatprep.subr.mxu0 0.0
    %643 = vmatpush2.msra.mxu0 0.0
    %644 = vmatprep.subr.mxu0 0.0
    %645 = vmatpush2.msra.mxu0 0.0
    %646 = vmatprep.subr.mxu0 0.0
    %647 = vmatpush2.msra.mxu0 0.0
    %648 = vmatprep.subr.mxu0 0.0
    %649 = vmatpush2.msra.mxu0 0.0
    %650 = vmatprep.subr.mxu0 0.0
    %651 = vmatpush2.msra.mxu0 0.0
    %652 = vmatprep.subr.mxu0 0.0
    %653 = vmatpush2.msra.mxu0 0.0
    %654 = vmatprep.subr.mxu0 0.0
    %655 = vmatpush2.msra.mxu0 0.0
    %656 = vmatprep.subr.mxu0 0.0
    %657 = vmatpush2.msra.mxu0 0.0
    %658 = vmatprep.subr.mxu0 0.0
    %659 = vmatpush2.msra.mxu0 0.0
    %660 = vmatprep.subr.mxu0 0.0
    %661 = vmatpush2.msra.mxu0 0.0
    %662 = vmatprep.subr.mxu0 0.0
    %663 = vmatpush2.msra.mxu0 0.0
    %664 = vmatprep.subr.mxu0 0.0
    %665 = vmatpush2.msra.mxu0 0.0
    %666 = vmatprep.subr.mxu0 0.0
    %667 = vmatpush2.msra.mxu0 0.0
    %668 = vmatprep.mubr.f32.mxu0 0.0
    %v669 = vand.u32 %v515, 4294901760
    %670 = vmatmul.mubr.f32.gmra.mxu0 %v669
    %v671 = vpop.f32.mrf.mxu0
    %v672 = vadd.f32 %v591, %v671
    %v673 = vpop.f32.mrf.mxu0
    %674 = vdwg.mxu0
    %675 = vmatprep.subr.mxu0 0.0
    %676 = vmatpush1.msra.mxu0 0.0
    %677 = vmatprep.subr.mxu0 0.0
    %678 = vmatpush1.msra.mxu0 0.0
    %679 = vmatprep.subr.mxu0 0.0
    %680 = vmatpush1.msra.mxu0 0.0
    %681 = vmatprep.subr.mxu0 0.0
    %682 = vmatpush1.msra.mxu0 0.0
    %683 = vmatprep.subr.mxu0 0.0
    %684 = vmatpush1.msra.mxu0 0.0
    %685 = vmatprep.subr.mxu0 0.0
    %686 = vmatpush1.msra.mxu0 0.0
    %687 = vmatprep.subr.mxu0 0.0
    %688 = vmatpush1.msra.mxu0 0.0
    %689 = vmatprep.subr.mxu0 0.0
    %690 = vmatpush1.msra.mxu0 0.0
    %691 = vmatprep.subr.mxu0 0.0
    %692 = vmatpush1.msra.mxu0 0.0
    %693 = vmatprep.subr.mxu0 0.0
    %694 = vmatpush1.msra.mxu0 0.0
    %695 = vmatprep.subr.mxu0 0.0
    %696 = vmatpush1.msra.mxu0 0.0
    %697 = vmatprep.subr.mxu0 0.0
    %698 = vmatpush1.msra.mxu0 0.0
    %699 = vmatprep.subr.mxu0 0.0
    %700 = vmatpush1.msra.mxu0 0.0
    %701 = vmatprep.subr.mxu0 0.0
    %702 = vmatpush1.msra.mxu0 0.0
    %703 = vmatprep.subr.mxu0 0.0
    %v704 = vand.u32 %v60, 4294901760
    %v705 = vsub.f32 %v60, %v704
    %706 = vmatpush1.msra.mxu0 %v705
    %707 = vmatprep.subr.mxu0 0.0
    %v708 = vand.u32 %v59, 4294901760
    %v709 = vsub.f32 %v59, %v708
    %710 = vmatpush1.msra.mxu0 %v709
    %711 = vmatprep.subr.mxu0 0.0
    %712 = vmatpush2.msra.mxu0 0.0
    %713 = vmatprep.subr.mxu0 0.0
    %714 = vmatpush2.msra.mxu0 0.0
    %715 = vmatprep.subr.mxu0 0.0
    %716 = vmatpush2.msra.mxu0 0.0
    %717 = vmatprep.subr.mxu0 0.0
    %718 = vmatpush2.msra.mxu0 0.0
    %719 = vmatprep.subr.mxu0 0.0
    %720 = vmatpush2.msra.mxu0 0.0
    %721 = vmatprep.subr.mxu0 0.0
    %722 = vmatpush2.msra.mxu0 0.0
    %723 = vmatprep.subr.mxu0 0.0
    %724 = vmatpush2.msra.mxu0 0.0
    %725 = vmatprep.subr.mxu0 0.0
    %726 = vmatpush2.msra.mxu0 0.0
    %727 = vmatprep.subr.mxu0 0.0
    %728 = vmatpush2.msra.mxu0 0.0
    %729 = vmatprep.subr.mxu0 0.0
    %730 = vmatpush2.msra.mxu0 0.0
    %731 = vmatprep.subr.mxu0 0.0
    %732 = vmatpush2.msra.mxu0 0.0
    %733 = vmatprep.subr.mxu0 0.0
    %734 = vmatpush2.msra.mxu0 0.0
    %735 = vmatprep.subr.mxu0 0.0
    %736 = vmatpush2.msra.mxu0 0.0
    %737 = vmatprep.subr.mxu0 0.0
    %738 = vmatpush2.msra.mxu0 0.0
    %739 = vmatprep.subr.mxu0 0.0
    %740 = vmatpush2.msra.mxu0 0.0
    %741 = vmatprep.subr.mxu0 0.0
    %742 = vmatpush2.msra.mxu0 0.0
    %743 = vmatprep.mubr.f32.mxu0 0.0
    %v744 = vand.u32 %v515, 4294901760
    %v745 = vsub.f32 %v515, %v744
    %746 = vmatmul.mubr.f32.gmra.mxu0 %v745
    %v747 = vpop.f32.mrf.mxu0
    %v748 = vadd.f32 %v672, %v747
    %v749 = vpop.f32.mrf.mxu0
    %750 = vdwg.mxu0
    %751 = vmatprep.subr.mxu0 0.0
    %752 = vmatpush1.msra.mxu0 0.0
    %753 = vmatprep.subr.mxu0 0.0
    %754 = vmatpush1.msra.mxu0 0.0
    %755 = vmatprep.subr.mxu0 0.0
    %756 = vmatpush1.msra.mxu0 0.0
    %757 = vmatprep.subr.mxu0 0.0
    %758 = vmatpush1.msra.mxu0 0.0
    %759 = vmatprep.subr.mxu0 0.0
    %760 = vmatpush1.msra.mxu0 0.0
    %761 = vmatprep.subr.mxu0 0.0
    %762 = vmatpush1.msra.mxu0 0.0
    %763 = vmatprep.subr.mxu0 0.0
    %764 = vmatpush1.msra.mxu0 0.0
    %765 = vmatprep.subr.mxu0 0.0
    %766 = vmatpush1.msra.mxu0 0.0
    %767 = vmatprep.subr.mxu0 0.0
    %768 = vmatpush1.msra.mxu0 0.0
    %769 = vmatprep.subr.mxu0 0.0
    %770 = vmatpush1.msra.mxu0 0.0
    %771 = vmatprep.subr.mxu0 0.0
    %772 = vmatpush1.msra.mxu0 0.0
    %773 = vmatprep.subr.mxu0 0.0
    %774 = vmatpush1.msra.mxu0 0.0
    %775 = vmatprep.subr.mxu0 0.0
    %776 = vmatpush1.msra.mxu0 0.0
    %777 = vmatprep.subr.mxu0 0.0
    %778 = vmatpush1.msra.mxu0 0.0
    %779 = vmatprep.subr.mxu0 0.0
    %v780 = vand.u32 %v60, 4294901760
    %781 = vmatpush1.msra.mxu0 %v780
    %782 = vmatprep.subr.mxu0 0.0
    %v783 = vand.u32 %v59, 4294901760
    %784 = vmatpush1.msra.mxu0 %v783
    %785 = vmatprep.subr.mxu0 0.0
    %786 = vmatpush2.msra.mxu0 0.0
    %787 = vmatprep.subr.mxu0 0.0
    %788 = vmatpush2.msra.mxu0 0.0
    %789 = vmatprep.subr.mxu0 0.0
    %790 = vmatpush2.msra.mxu0 0.0
    %791 = vmatprep.subr.mxu0 0.0
    %792 = vmatpush2.msra.mxu0 0.0
    %793 = vmatprep.subr.mxu0 0.0
    %794 = vmatpush2.msra.mxu0 0.0
    %795 = vmatprep.subr.mxu0 0.0
    %796 = vmatpush2.msra.mxu0 0.0
    %797 = vmatprep.subr.mxu0 0.0
    %798 = vmatpush2.msra.mxu0 0.0
    %799 = vmatprep.subr.mxu0 0.0
    %800 = vmatpush2.msra.mxu0 0.0
    %801 = vmatprep.subr.mxu0 0.0
    %802 = vmatpush2.msra.mxu0 0.0
    %803 = vmatprep.subr.mxu0 0.0
    %804 = vmatpush2.msra.mxu0 0.0
    %805 = vmatprep.subr.mxu0 0.0
    %806 = vmatpush2.msra.mxu0 0.0
    %807 = vmatprep.subr.mxu0 0.0
    %808 = vmatpush2.msra.mxu0 0.0
    %809 = vmatprep.subr.mxu0 0.0
    %810 = vmatpush2.msra.mxu0 0.0
    %811 = vmatprep.subr.mxu0 0.0
    %812 = vmatpush2.msra.mxu0 0.0
    %813 = vmatprep.subr.mxu0 0.0
    %814 = vmatpush2.msra.mxu0 0.0
    %815 = vmatprep.subr.mxu0 0.0
    %816 = vmatpush2.msra.mxu0 0.0
    %817 = vmatprep.mubr.f32.mxu0 0.0
    %v818 = vand.u32 %v515, 4294901760
    %v819 = vsub.f32 %v515, %v818
    %v820 = vand.u32 %v819, 4294901760
    %821 = vmatmul.mubr.f32.gmra.mxu0 %v820
    %v822 = vpop.f32.mrf.mxu0
    %v823 = vadd.f32 %v748, %v822
    %v824 = vpop.f32.mrf.mxu0
    %825 = vdwg.mxu0
    %826 = vmatprep.subr.mxu0 0.0
    %827 = vmatpush1.msra.mxu0 0.0
    %828 = vmatprep.subr.mxu0 0.0
    %829 = vmatpush1.msra.mxu0 0.0
    %830 = vmatprep.subr.mxu0 0.0
    %831 = vmatpush1.msra.mxu0 0.0
    %832 = vmatprep.subr.mxu0 0.0
    %833 = vmatpush1.msra.mxu0 0.0
    %834 = vmatprep.subr.mxu0 0.0
    %835 = vmatpush1.msra.mxu0 0.0
    %836 = vmatprep.subr.mxu0 0.0
    %837 = vmatpush1.msra.mxu0 0.0
    %838 = vmatprep.subr.mxu0 0.0
    %839 = vmatpush1.msra.mxu0 0.0
    %840 = vmatprep.subr.mxu0 0.0
    %841 = vmatpush1.msra.mxu0 0.0
    %842 = vmatprep.subr.mxu0 0.0
    %843 = vmatpush1.msra.mxu0 0.0
    %844 = vmatprep.subr.mxu0 0.0
    %845 = vmatpush1.msra.mxu0 0.0
    %846 = vmatprep.subr.mxu0 0.0
    %847 = vmatpush1.msra.mxu0 0.0
    %848 = vmatprep.subr.mxu0 0.0
    %849 = vmatpush1.msra.mxu0 0.0
    %850 = vmatprep.subr.mxu0 0.0
    %851 = vmatpush1.msra.mxu0 0.0
    %852 = vmatprep.subr.mxu0 0.0
    %853 = vmatpush1.msra.mxu0 0.0
    %854 = vmatprep.subr.mxu0 0.0
    %v855 = vand.u32 %v60, 4294901760
    %v856 = vsub.f32 %v60, %v855
    %v857 = vand.u32 %v856, 4294901760
    %858 = vmatpush1.msra.mxu0 %v857
    %859 = vmatprep.subr.mxu0 0.0
    %v860 = vand.u32 %v59, 4294901760
    %v861 = vsub.f32 %v59, %v860
    %v862 = vand.u32 %v861, 4294901760
    %863 = vmatpush1.msra.mxu0 %v862
    %864 = vmatprep.subr.mxu0 0.0
    %865 = vmatpush2.msra.mxu0 0.0
    %866 = vmatprep.subr.mxu0 0.0
    %867 = vmatpush2.msra.mxu0 0.0
    %868 = vmatprep.subr.mxu0 0.0
    %869 = vmatpush2.msra.mxu0 0.0
    %870 = vmatprep.subr.mxu0 0.0
    %871 = vmatpush2.msra.mxu0 0.0
    %872 = vmatprep.subr.mxu0 0.0
    %873 = vmatpush2.msra.mxu0 0.0
    %874 = vmatprep.subr.mxu0 0.0
    %875 = vmatpush2.msra.mxu0 0.0
    %876 = vmatprep.subr.mxu0 0.0
    %877 = vmatpush2.msra.mxu0 0.0
    %878 = vmatprep.subr.mxu0 0.0
    %879 = vmatpush2.msra.mxu0 0.0
    %880 = vmatprep.subr.mxu0 0.0
    %881 = vmatpush2.msra.mxu0 0.0
    %882 = vmatprep.subr.mxu0 0.0
    %883 = vmatpush2.msra.mxu0 0.0
    %884 = vmatprep.subr.mxu0 0.0
    %885 = vmatpush2.msra.mxu0 0.0
    %886 = vmatprep.subr.mxu0 0.0
    %887 = vmatpush2.msra.mxu0 0.0
    %888 = vmatprep.subr.mxu0 0.0
    %889 = vmatpush2.msra.mxu0 0.0
    %890 = vmatprep.subr.mxu0 0.0
    %891 = vmatpush2.msra.mxu0 0.0
    %892 = vmatprep.subr.mxu0 0.0
    %893 = vmatpush2.msra.mxu0 0.0
    %894 = vmatprep.subr.mxu0 0.0
    %895 = vmatpush2.msra.mxu0 0.0
    %896 = vmatprep.mubr.f32.mxu0 0.0
    %v897 = vand.u32 %v515, 4294901760
    %898 = vmatmul.mubr.f32.gmra.mxu0 %v897
    %v899 = vpop.f32.mrf.mxu0
    %v900 = vadd.f32 %v823, %v899
    %v901 = vpop.f32.mrf.mxu0
    %902 = vdwg.mxu0
    %903 = vmatprep.subr.mxu0 0.0
    %904 = vmatpush1.msra.mxu0 0.0
    %905 = vmatprep.subr.mxu0 0.0
    %906 = vmatpush1.msra.mxu0 0.0
    %907 = vmatprep.subr.mxu0 0.0
    %908 = vmatpush1.msra.mxu0 0.0
    %909 = vmatprep.subr.mxu0 0.0
    %910 = vmatpush1.msra.mxu0 0.0
    %911 = vmatprep.subr.mxu0 0.0
    %912 = vmatpush1.msra.mxu0 0.0
    %913 = vmatprep.subr.mxu0 0.0
    %914 = vmatpush1.msra.mxu0 0.0
    %915 = vmatprep.subr.mxu0 0.0
    %916 = vmatpush1.msra.mxu0 0.0
    %917 = vmatprep.subr.mxu0 0.0
    %918 = vmatpush1.msra.mxu0 0.0
    %919 = vmatprep.subr.mxu0 0.0
    %920 = vmatpush1.msra.mxu0 0.0
    %921 = vmatprep.subr.mxu0 0.0
    %922 = vmatpush1.msra.mxu0 0.0
    %923 = vmatprep.subr.mxu0 0.0
    %924 = vmatpush1.msra.mxu0 0.0
    %925 = vmatprep.subr.mxu0 0.0
    %926 = vmatpush1.msra.mxu0 0.0
    %927 = vmatprep.subr.mxu0 0.0
    %928 = vmatpush1.msra.mxu0 0.0
    %929 = vmatprep.subr.mxu0 0.0
    %930 = vmatpush1.msra.mxu0 0.0
    %931 = vmatprep.subr.mxu0 0.0
    %v932 = vand.u32 %v60, 4294901760
    %933 = vmatpush1.msra.mxu0 %v932
    %934 = vmatprep.subr.mxu0 0.0
    %v935 = vand.u32 %v59, 4294901760
    %936 = vmatpush1.msra.mxu0 %v935
    %937 = vmatprep.subr.mxu0 0.0
    %938 = vmatpush2.msra.mxu0 0.0
    %939 = vmatprep.subr.mxu0 0.0
    %940 = vmatpush2.msra.mxu0 0.0
    %941 = vmatprep.subr.mxu0 0.0
    %942 = vmatpush2.msra.mxu0 0.0
    %943 = vmatprep.subr.mxu0 0.0
    %944 = vmatpush2.msra.mxu0 0.0
    %945 = vmatprep.subr.mxu0 0.0
    %946 = vmatpush2.msra.mxu0 0.0
    %947 = vmatprep.subr.mxu0 0.0
    %948 = vmatpush2.msra.mxu0 0.0
    %949 = vmatprep.subr.mxu0 0.0
    %950 = vmatpush2.msra.mxu0 0.0
    %951 = vmatprep.subr.mxu0 0.0
    %952 = vmatpush2.msra.mxu0 0.0
    %953 = vmatprep.subr.mxu0 0.0
    %954 = vmatpush2.msra.mxu0 0.0
    %955 = vmatprep.subr.mxu0 0.0
    %956 = vmatpush2.msra.mxu0 0.0
    %957 = vmatprep.subr.mxu0 0.0
    %958 = vmatpush2.msra.mxu0 0.0
    %959 = vmatprep.subr.mxu0 0.0
    %960 = vmatpush2.msra.mxu0 0.0
    %961 = vmatprep.subr.mxu0 0.0
    %962 = vmatpush2.msra.mxu0 0.0
    %963 = vmatprep.subr.mxu0 0.0
    %964 = vmatpush2.msra.mxu0 0.0
    %965 = vmatprep.subr.mxu0 0.0
    %966 = vmatpush2.msra.mxu0 0.0
    %967 = vmatprep.subr.mxu0 0.0
    %968 = vmatpush2.msra.mxu0 0.0
    %969 = vmatprep.mubr.f32.mxu0 0.0
    %v970 = vand.u32 %v515, 4294901760
    %971 = vmatmul.mubr.f32.gmra.mxu0 %v970
    %v972 = vpop.f32.mrf.mxu0
    %v973 = vadd.f32 %v900, %v972
    %v974 = vpop.f32.mrf.mxu0
    %975 = vdwg.mxu0
    %976 = vst.msk [vmem:[#allocation9] sm:$0xff] %vm513, %v973
    %s977 = sadd.s32 0, 1
    %p978 = scmp.lt.s32.totalorder %s977, 1
    // Predicated region
    $region30: #{tpu_custom_call.1} parent=1 // pred_check
      %p979 = pneg %p978
    $region31: #{tpu_custom_call.1} parent=1 // pred_check_branch
      %981 = sbr.rel (%p979) target = $region33
    $region32: #{tpu_custom_call.1} parent=1 // pred_region
      %982 = vrot.lane.b32.xlu0 %v58, 120
      %v983 = vpop.permute.xlu0 %982
      %985 = vst.msk [vmem:[#allocation2] sm:$0xff] %vm63, %v983
    $region33: #{tpu_custom_call.1} parent=1 // pred_fallthru
      _
    // Predicated region
    $region34: #{tpu_custom_call.1} parent=1 // pred_check
      _
    $region35: #{tpu_custom_call.1} parent=1 // pred_check_branch
      %987 = sbr.rel (0) target = $region37
    $region36: #{tpu_custom_call.1} parent=1 // pred_region
      %s989 = ssub.s32 128, 128
      %990 = vsyncadd [#allocation5], %s989
      %s992 = sshll.u32 [#allocation9], 4
      %s993 = int_to_ptr.vmem [resolvable:$true] %s992
      %995 = dma.vmem_to_hbm [thread:$0]  %s993, 128, %s3, [#allocation5]
    $region37: #{tpu_custom_call.1} parent=1 // pred_fallthru
      _
    // Predicated region
    $region38: #{tpu_custom_call.1} parent=1 // pred_check
      _
    $region39: #{tpu_custom_call.1} parent=1 // pred_check_branch
      %997 = sbr.rel (0) target = $region41
    $region40: #{tpu_custom_call.1} parent=1 // pred_region
      %998 = dma.done [#allocation5], 128
    $region41: #{tpu_custom_call.1} parent=1 // pred_fallthru
      _
    %999 = vsyncpa [#allocation4], 1
    %1000 = vsyncpa [#allocation7], 1
    %1001 = vsyncpa [#allocation5], 1

</llo_original>
